<compile_context>
chip_gen: v7x
topology: tpu7x:2x2x1
jax: 0.10.0
libtpu: 0.0.40
codegen_flags: <defaults>
</compile_context>

<pallas_src>
import functools

import jax
import jax.numpy as jnp
from jax.experimental import pallas as pl
from jax.experimental.pallas import tpu as pltpu


def _round_up(n, m):
    return ((n + m - 1) // m) * m


def dueling_qlnn_kernel(x_ref, w1_ref, b1_ref, w2_ref, b2_ref,
                        wh_ref, bh_ref, q_ref, *, num_actions):
    # In-kernel bf16 cast of the activations (MXU operands); f32 accumulation.
    x = x_ref[...].astype(jnp.bfloat16)

    # shared trunk: Linear + ReLU, Linear + ReLU (bias/ReLU in f32).
    h = jnp.dot(x, w1_ref[...], preferred_element_type=jnp.float32) + b1_ref[...]
    h = jnp.maximum(h, 0.0).astype(jnp.bfloat16)
    h = jnp.dot(h, w2_ref[...], preferred_element_type=jnp.float32) + b2_ref[...]
    h = jnp.maximum(h, 0.0).astype(jnp.bfloat16)

    # fused heads: columns [0, A) = advantage, column A = value, rest = 0 pad.
    head = jnp.dot(h, wh_ref[...], preferred_element_type=jnp.float32) + bh_ref[...]

    adv = head[:, :num_actions]                      # (B, A)
    val = head[:, num_actions:num_actions + 1]       # (B, 1)

    # avgAdv = (1/len(actions)) * sum(adv): Python sum() => batch-axis sum.
    avg = jnp.sum(adv, axis=0, keepdims=True) * (1.0 / num_actions)   # (1, A)

    # q = val + (adv - avgAdv); single small (B, A) store.
    q_ref[...] = (val + (adv - avg)).astype(q_ref.dtype)


def pack_params(params):
    """One-time (init / param-update time) weight packing.

    Concatenates the value/advantage heads as [advantage | value], zero-pads
    the head to a 128-lane multiple for the MXU, and casts all MXU-side
    weights to bf16.  Biases stay f32 (added after f32 accumulation).
    Keeping this out of the per-call path removes 3-5 XLA ops per forward.
    """
    (w1, b1, w2, b2, wv, bv, wa, ba) = params
    A = wa.shape[1]
    head_w = jnp.concatenate([wa, wv], axis=1)          # (H, A+1)
    head_b = jnp.concatenate([ba, bv], axis=1)          # (1, A+1)
    P = _round_up(A + 1, 128)
    head_w = jnp.pad(head_w, ((0, 0), (0, P - (A + 1))))
    head_b = jnp.pad(head_b, ((0, 0), (0, P - (A + 1))))
    return (w1.astype(jnp.bfloat16), b1,
            w2.astype(jnp.bfloat16), b2,
            head_w.astype(jnp.bfloat16), head_b)


def dueling_qlnn_forward(x, packed_params, *, num_actions):
    """x: (B, F) float32 feature vectors.  Returns q: (B, num_actions) f32.

    `packed_params` must come from pack_params().  Call this under jax.jit
    (see __main__) — the kernel itself is ~1-2 us, so eager per-op dispatch
    would dominate otherwise.
    """
    (w1b, b1, w2b, b2, whb, bh) = packed_params
    B = x.shape[0]
    A = num_actions
    args = (x, w1b, b1, w2b, b2, whb, bh)

    def full(a):
        return pl.BlockSpec(a.shape, lambda: (0,) * a.ndim)

    return pl.pallas_call(
        functools.partial(dueling_qlnn_kernel, num_actions=A),
        out_shape=jax.ShapeDtypeStruct((B, A), jnp.float32),
        grid=(),
        in_specs=[full(a) for a in args],
        out_specs=pl.BlockSpec((B, A), lambda: (0, 0)),
    )(*args)


def init_params(key, in_features, hidden, num_actions):
    """Deterministic init mimicking torch.nn.Linear default U(-1/sqrt(fan_in), +)."""
    def linear(key, fan_in, fan_out):
        kw, kb = jax.random.split(key)
        bound = 1.0 / jnp.sqrt(jnp.float32(fan_in))
        w = jax.random.uniform(kw, (fan_in, fan_out), jnp.float32, -bound, bound)
        b = jax.random.uniform(kb, (1, fan_out), jnp.float32, -bound, bound)
        return w, b

    k1, k2, k3, k4 = jax.random.split(key, 4)
    w1, b1 = linear(k1, in_features, hidden)
    w2, b2 = linear(k2, hidden, hidden)
    wv, bv = linear(k3, hidden, 1)
    wa, ba = linear(k4, hidden, num_actions)
    return (w1, b1, w2, b2, wv, bv, wa, ba)


def reference_forward(x, params, num_actions, quantize_bf16=False):
    """Pure-JAX reference reproducing the PyTorch forward exactly.

    quantize_bf16=True mirrors the kernel's bf16 MXU operand rounding so the
    comparison against the kernel is tight.
    """
    (w1, b1, w2, b2, wv, bv, wa, ba) = params
    if quantize_bf16:
        q_ = lambda t: t.astype(jnp.bfloat16).astype(jnp.float32)
    else:
        q_ = lambda t: t
    h = jnp.maximum(q_(x) @ q_(w1) + b1, 0.0)
    h = jnp.maximum(q_(h) @ q_(w2) + b2, 0.0)
    val = q_(h) @ q_(wv) + bv
    adv = q_(h) @ q_(wa) + ba
    avg_adv = jnp.sum(adv, axis=0) / num_actions   # Python sum() => dim-0 sum
    return val + (adv - avg_adv)


if __name__ == "__main__":
    # B matches the module's trainModel batchSize default (128) so the matmul
    # M-dim fills full (8,128) tiles; F/H/A are small feature-vector sizes.
    B, F, H, A = 128, 32, 32, 8

    key = jax.random.PRNGKey(0)
    kx, kp = jax.random.split(key)
    x = jax.random.normal(kx, (B, F), jnp.float32)
    params = init_params(kp, F, H, A)

    # One-time weight packing (hoisted out of the hot path).
    packed = jax.tree_util.tree_map(jax.block_until_ready, pack_params(params))

    # The whole forward (just the pallas_call now) under one jit.
    fwd = jax.jit(functools.partial(dueling_qlnn_forward, num_actions=A))

    q = jax.block_until_ready(fwd(x, packed))
    assert q.shape == (B, A)

    q_ref_bf16 = reference_forward(x, params, A, quantize_bf16=True)
    q_ref_f32 = reference_forward(x, params, A, quantize_bf16=False)
    assert jnp.allclose(q, q_ref_bf16, atol=2e-3, rtol=2e-3), \
        "mismatch vs bf16-quantized reference"
    assert jnp.allclose(q, q_ref_f32, atol=6e-2, rtol=6e-2), \
        "mismatch vs f32 reference"

    print("KERNEL_OK")
</pallas_src>

<mosaic_0001>
module attributes {stable_mosaic.version = 11 : i64} {
  func.func @dueling_qlnn_kernel(%arg0: memref<128x32xf32, #tpu.memory_space<vmem>>, %arg1: memref<32x32xbf16, #tpu.memory_space<vmem>>, %arg2: memref<1x32xf32, #tpu.memory_space<vmem>>, %arg3: memref<32x32xbf16, #tpu.memory_space<vmem>>, %arg4: memref<1x32xf32, #tpu.memory_space<vmem>>, %arg5: memref<32x128xbf16, #tpu.memory_space<vmem>>, %arg6: memref<1x128xf32, #tpu.memory_space<vmem>>, %arg7: memref<128x8xf32, #tpu.memory_space<vmem>>) attributes {dimension_semantics = [], scalar_prefetch = 0 : i64, scratch_operands = 0 : i64, tpu.core_type = #tpu.core_type<tc>} {
    %c0 = arith.constant 0 : index
    %c0_0 = arith.constant 0 : index
    %0 = vector.load %arg0[%c0, %c0_0] : memref<128x32xf32, #tpu.memory_space<vmem>>, vector<128x32xf32>
    %1 = arith.truncf %0 : vector<128x32xf32> to vector<128x32xbf16>
    %c0_1 = arith.constant 0 : index
    %c0_2 = arith.constant 0 : index
    %2 = vector.load %arg1[%c0_1, %c0_2] : memref<32x32xbf16, #tpu.memory_space<vmem>>, vector<32x32xbf16>
    %cst = arith.constant dense<0.000000e+00> : vector<128x32xf32>
    %3 = tpu.matmul %1, %2, %cst {dimension_numbers = #tpu.dot_dimension_numbers<[1], [0], [0], [1], [0, 0, 1, 1], [], []>} : vector<128x32xbf16>, vector<32x32xbf16>, vector<128x32xf32> -> vector<128x32xf32>
    %c0_3 = arith.constant 0 : index
    %c0_4 = arith.constant 0 : index
    %4 = vector.load %arg2[%c0_3, %c0_4] : memref<1x32xf32, #tpu.memory_space<vmem>>, vector<1x32xf32>
    %5 = vector.broadcast %4 : vector<1x32xf32> to vector<128x32xf32>
    %6 = arith.addf %3, %5 : vector<128x32xf32>
    %cst_5 = arith.constant 0.000000e+00 : f32
    %7 = vector.broadcast %cst_5 : f32 to vector<128x32xf32>
    %8 = arith.maximumf %6, %7 : vector<128x32xf32>
    %9 = arith.truncf %8 : vector<128x32xf32> to vector<128x32xbf16>
    %c0_6 = arith.constant 0 : index
    %c0_7 = arith.constant 0 : index
    %10 = vector.load %arg3[%c0_6, %c0_7] : memref<32x32xbf16, #tpu.memory_space<vmem>>, vector<32x32xbf16>
    %cst_8 = arith.constant dense<0.000000e+00> : vector<128x32xf32>
    %11 = tpu.matmul %9, %10, %cst_8 {dimension_numbers = #tpu.dot_dimension_numbers<[1], [0], [0], [1], [0, 0, 1, 1], [], []>} : vector<128x32xbf16>, vector<32x32xbf16>, vector<128x32xf32> -> vector<128x32xf32>
    %c0_9 = arith.constant 0 : index
    %c0_10 = arith.constant 0 : index
    %12 = vector.load %arg4[%c0_9, %c0_10] : memref<1x32xf32, #tpu.memory_space<vmem>>, vector<1x32xf32>
    %13 = vector.broadcast %12 : vector<1x32xf32> to vector<128x32xf32>
    %14 = arith.addf %11, %13 : vector<128x32xf32>
    %cst_11 = arith.constant 0.000000e+00 : f32
    %15 = vector.broadcast %cst_11 : f32 to vector<128x32xf32>
    %16 = arith.maximumf %14, %15 : vector<128x32xf32>
    %17 = arith.truncf %16 : vector<128x32xf32> to vector<128x32xbf16>
    %c0_12 = arith.constant 0 : index
    %c0_13 = arith.constant 0 : index
    %18 = vector.load %arg5[%c0_12, %c0_13] : memref<32x128xbf16, #tpu.memory_space<vmem>>, vector<32x128xbf16>
    %cst_14 = arith.constant dense<0.000000e+00> : vector<128x128xf32>
    %19 = tpu.matmul %17, %18, %cst_14 {dimension_numbers = #tpu.dot_dimension_numbers<[1], [0], [0], [1], [0, 0, 1, 1], [], []>} : vector<128x32xbf16>, vector<32x128xbf16>, vector<128x128xf32> -> vector<128x128xf32>
    %c0_15 = arith.constant 0 : index
    %c0_16 = arith.constant 0 : index
    %20 = vector.load %arg6[%c0_15, %c0_16] : memref<1x128xf32, #tpu.memory_space<vmem>>, vector<1x128xf32>
    %21 = vector.broadcast %20 : vector<1x128xf32> to vector<128x128xf32>
    %22 = arith.addf %19, %21 : vector<128x128xf32>
    %23 = vector.extract_strided_slice %22 {offsets = [0, 0], sizes = [128, 8], strides = [1, 1]} : vector<128x128xf32> to vector<128x8xf32>
    %24 = vector.extract_strided_slice %22 {offsets = [0, 8], sizes = [128, 1], strides = [1, 1]} : vector<128x128xf32> to vector<128x1xf32>
    %cst_17 = arith.constant dense<0.000000e+00> : vector<8xf32>
    %25 = vector.multi_reduction <add>, %23, %cst_17 [0] : vector<128x8xf32> to vector<8xf32>
    %26 = vector.shape_cast %25 : vector<8xf32> to vector<1x8xf32>
    %cst_18 = arith.constant 1.250000e-01 : f32
    %27 = vector.broadcast %cst_18 : f32 to vector<1x8xf32>
    %28 = arith.mulf %26, %27 : vector<1x8xf32>
    %29 = vector.broadcast %28 : vector<1x8xf32> to vector<128x8xf32>
    %30 = arith.subf %23, %29 : vector<128x8xf32>
    %31 = vector.broadcast %24 : vector<128x1xf32> to vector<128x8xf32>
    %32 = arith.addf %31, %30 : vector<128x8xf32>
    %c0_19 = arith.constant 0 : index
    %c0_20 = arith.constant 0 : index
    %33 = vector.load %arg7[%c0_19, %c0_20] : memref<128x8xf32, #tpu.memory_space<vmem>>, vector<128x8xf32>
    tpu.vector_store %arg7[%c0_19, %c0_20], %32 {strides = array<i32>} : memref<128x8xf32, #tpu.memory_space<vmem>>, vector<128x8xf32>,
    return
  }
}

</mosaic_0001>

<llo_original>
// kernel: dueling_qlnn_forward.1
$region0: #{dueling_qlnn_forward.1}
  #allocation0 [shape = 'u32[]', space=smem, size = 0x4, offset = 0x4, fixed_abs, tag = 'smem constant byte address 0x4 - core index']
  #allocation1 [shape = 'u32[144,128]{1,0:T(1,128)}', space=vmem, size = 0x12000, scoped, tag = 'internal scratch']
  %s0 = inlined_call_operand.vmem [shape: f32[128,32], index: 0, kind: input, shape index: {}]
  %s1 = inlined_call_operand.vmem [shape: bf16[32,32], index: 1, kind: input, shape index: {}]
  %s2 = inlined_call_operand.vmem [shape: f32[1,32], index: 2, kind: input, shape index: {}]
  %s3 = inlined_call_operand.vmem [shape: bf16[32,32], index: 3, kind: input, shape index: {}]
  %s4 = inlined_call_operand.vmem [shape: f32[1,32], index: 4, kind: input, shape index: {}]
  %s5 = inlined_call_operand.vmem [shape: bf16[32,128], index: 5, kind: input, shape index: {}]
  %s6 = inlined_call_operand.vmem [shape: f32[1,128], index: 6, kind: input, shape index: {}]
  %s7 = inlined_call_operand.vmem [shape: f32[128,8], index: 7, kind: output, shape index: {}]
  %s8 = sld [smem:[#allocation0]]
  $region38: #{dueling_qlnn_forward.1} parent=0
    _
  %s10 = ssub.s32 1, %s8
  %s11 = scalar_select 0, %s10, %s8
  // Predicated region
  $region2: #{dueling_qlnn_forward.1} parent=0 // pred_check
    _
  $region3: #{dueling_qlnn_forward.1} parent=0 // pred_check_branch
    %13 = sbr.rel (0) target = $region5
  $region4: #{dueling_qlnn_forward.1} parent=0 // pred_region
    _
  $region5: #{dueling_qlnn_forward.1} parent=0 // pred_fallthru
    _
  // Predicated region
  $region6: #{dueling_qlnn_forward.1} parent=0 // pred_check
    _
  $region7: #{dueling_qlnn_forward.1} parent=0 // pred_check_branch
    %15 = sbr.rel (0) target = $region9
  $region8: #{dueling_qlnn_forward.1} parent=0 // pred_region
    _
  $region9: #{dueling_qlnn_forward.1} parent=0 // pred_fallthru
    _
  // Predicated region
  $region10: #{dueling_qlnn_forward.1} parent=0 // pred_check
    _
  $region11: #{dueling_qlnn_forward.1} parent=0 // pred_check_branch
    %17 = sbr.rel (0) target = $region13
  $region12: #{dueling_qlnn_forward.1} parent=0 // pred_region
    _
  $region13: #{dueling_qlnn_forward.1} parent=0 // pred_fallthru
    _
  // Predicated region
  $region14: #{dueling_qlnn_forward.1} parent=0 // pred_check
    _
  $region15: #{dueling_qlnn_forward.1} parent=0 // pred_check_branch
    %19 = sbr.rel (0) target = $region17
  $region16: #{dueling_qlnn_forward.1} parent=0 // pred_region
    _
  $region17: #{dueling_qlnn_forward.1} parent=0 // pred_fallthru
    _
  // Predicated region
  $region18: #{dueling_qlnn_forward.1} parent=0 // pred_check
    _
  $region19: #{dueling_qlnn_forward.1} parent=0 // pred_check_branch
    %21 = sbr.rel (0) target = $region21
  $region20: #{dueling_qlnn_forward.1} parent=0 // pred_region
    _
  $region21: #{dueling_qlnn_forward.1} parent=0 // pred_fallthru
    _
  // Predicated region
  $region22: #{dueling_qlnn_forward.1} parent=0 // pred_check
    _
  $region23: #{dueling_qlnn_forward.1} parent=0 // pred_check_branch
    %23 = sbr.rel (0) target = $region25
  $region24: #{dueling_qlnn_forward.1} parent=0 // pred_region
    _
  $region25: #{dueling_qlnn_forward.1} parent=0 // pred_fallthru
    _
  // Predicated region
  $region26: #{dueling_qlnn_forward.1} parent=0 // pred_check
    _
  $region27: #{dueling_qlnn_forward.1} parent=0 // pred_check_branch
    %25 = sbr.rel (0) target = $region29
  $region28: #{dueling_qlnn_forward.1} parent=0 // pred_region
    _
  $region29: #{dueling_qlnn_forward.1} parent=0 // pred_fallthru
    _
  %v27 = vld [vmem:[%s0] sm:$0xff]
  %v28 = vld [vmem:[%s0 + $0x8] sm:$0xff]
  %v29 = vld [vmem:[%s0 + $0x10] sm:$0xff]
  %v30 = vld [vmem:[%s0 + $0x18] sm:$0xff]
  %v31 = vld [vmem:[%s0 + $0x20] sm:$0xff]
  %v32 = vld [vmem:[%s0 + $0x28] sm:$0xff]
  %v33 = vld [vmem:[%s0 + $0x30] sm:$0xff]
  %v34 = vld [vmem:[%s0 + $0x38] sm:$0xff]
  %v35 = vld [vmem:[%s0 + $0x40] sm:$0xff]
  %v36 = vld [vmem:[%s0 + $0x48] sm:$0xff]
  %v37 = vld [vmem:[%s0 + $0x50] sm:$0xff]
  %v38 = vld [vmem:[%s0 + $0x58] sm:$0xff]
  %v39 = vld [vmem:[%s0 + $0x60] sm:$0xff]
  %v40 = vld [vmem:[%s0 + $0x68] sm:$0xff]
  %v41 = vld [vmem:[%s0 + $0x70] sm:$0xff]
  %v42 = vld [vmem:[%s0 + $0x78] sm:$0xff]
  %v43 = vpack.c.bf16 %v28, %v27
  %v44 = vpack.c.bf16 %v30, %v29
  %v45 = vpack.c.bf16 %v32, %v31
  %v46 = vpack.c.bf16 %v34, %v33
  %v47 = vpack.c.bf16 %v36, %v35
  %v48 = vpack.c.bf16 %v38, %v37
  %v49 = vpack.c.bf16 %v40, %v39
  %v50 = vpack.c.bf16 %v42, %v41
  %v51 = vld [vmem:[%s1] sm:$0xf]
  %v52 = vld [vmem:[%s1 + $0x4] sm:$0xf]
  %v53 = vld [vmem:[%s1 + $0x8] sm:$0xf]
  %v54 = vld [vmem:[%s1 + $0xc] sm:$0xf]
  %v55 = vld [vmem:[%s2] sm:$0x1]
  %v57 = vlaneseq
  %v58 = vshrl.u32 %v57, 7
  %v59 = vsub.s32 0, %v58
  %v60 = vrot.slane %v55, %v59
  %v66 = vunpack.c.l.b16 %v51
  %v67 = vunpack.c.l.b16 %v52
  %v68 = vunpack.c.l.b16 %v53
  %v69 = vunpack.c.l.b16 %v54
  %v70 = vpack.c.b16 %v67, %v66
  %v71 = vpack.c.b16 %v69, %v68
  %vm74 = vcmask 261120
  %v76 = vsel %vm74, %v43, 0
  %v79 = vsel %vm74, %v44, 0
  %v82 = vsel %vm74, %v45, 0
  %v85 = vsel %vm74, %v46, 0
  %v88 = vsel %vm74, %v47, 0
  %v91 = vsel %vm74, %v48, 0
  %v94 = vsel %vm74, %v49, 0
  %v97 = vsel %vm74, %v50, 0
  %99 = vmatprep.subr.bf16.mxu0 0
  %100 = vmatpush1.bf16.msra.mxu0 %v70
  %101 = vmatprep.subr.bf16.mxu0 0
  %102 = vmatpush1.bf16.msra.mxu0 %v71
  %103 = vmatprep.subr.bf16.mxu0 0
  %104 = vmatpush1.bf16.msra.mxu0 0
  %105 = vmatprep.subr.bf16.mxu0 0
  %106 = vmatpush1.bf16.msra.mxu0 0
  %107 = vmatprep.subr.bf16.mxu0 0
  %108 = vmatpush1.bf16.msra.mxu0 0
  %109 = vmatprep.subr.bf16.mxu0 0
  %110 = vmatpush1.bf16.msra.mxu0 0
  %111 = vmatprep.subr.bf16.mxu0 0
  %112 = vmatpush1.bf16.msra.mxu0 0
  %113 = vmatprep.subr.bf16.mxu0 0
  %114 = vmatpush1.bf16.msra.mxu0 0
  %115 = vmatprep.subr.bf16.mxu0 0
  %116 = vmatpush1.bf16.msra.mxu0 0
  %117 = vmatprep.subr.bf16.mxu0 0
  %118 = vmatpush1.bf16.msra.mxu0 0
  %119 = vmatprep.subr.bf16.mxu0 0
  %120 = vmatpush1.bf16.msra.mxu0 0
  %121 = vmatprep.subr.bf16.mxu0 0
  %122 = vmatpush1.bf16.msra.mxu0 0
  %123 = vmatprep.subr.bf16.mxu0 0
  %124 = vmatpush1.bf16.msra.mxu0 0
  %125 = vmatprep.subr.bf16.mxu0 0
  %126 = vmatpush1.bf16.msra.mxu0 0
  %127 = vmatprep.subr.bf16.mxu0 0
  %128 = vmatpush1.bf16.msra.mxu0 0
  %129 = vmatprep.subr.bf16.mxu0 0
  %130 = vmatpush1.bf16.msra.mxu0 0
  %131 = vmatprep.mubr.bf16.mxu0 0
  %132 = vmatmul.mubr.bf16.gmra.mrb[0].mxu0 %v76
  %v133 = vpop.f32.mrb[0].mxu0
  %v134 = vadd.f32 %v60, %v133
  %v135 = vpop.f32.mrb[0].mxu0
  %v136 = vpop.f32.mrb[0].mxu0
  %v137 = vadd.f32 %v60, %v136
  %v138 = vpop.f32.mrb[0].mxu0
  %139 = vmatprep.mubr.bf16.mxu0 0
  %140 = vmatmul.mubr.bf16.gmra.mrb[0].mxu0 %v79
  %v141 = vpop.f32.mrb[0].mxu0
  %v142 = vadd.f32 %v60, %v141
  %v143 = vpop.f32.mrb[0].mxu0
  %v144 = vpop.f32.mrb[0].mxu0
  %v145 = vadd.f32 %v60, %v144
  %v146 = vpop.f32.mrb[0].mxu0
  %147 = vmatprep.mubr.bf16.mxu0 0
  %148 = vmatmul.mubr.bf16.gmra.mrb[0].mxu0 %v82
  %v149 = vpop.f32.mrb[0].mxu0
  %v150 = vadd.f32 %v60, %v149
  %v151 = vpop.f32.mrb[0].mxu0
  %v152 = vpop.f32.mrb[0].mxu0
  %v153 = vadd.f32 %v60, %v152
  %v154 = vpop.f32.mrb[0].mxu0
  %155 = vmatprep.mubr.bf16.mxu0 0
  %156 = vmatmul.mubr.bf16.gmra.mrb[0].mxu0 %v85
  %v157 = vpop.f32.mrb[0].mxu0
  %v158 = vadd.f32 %v60, %v157
  %v159 = vpop.f32.mrb[0].mxu0
  %v160 = vpop.f32.mrb[0].mxu0
  %v161 = vadd.f32 %v60, %v160
  %v162 = vpop.f32.mrb[0].mxu0
  %163 = vmatprep.mubr.bf16.mxu0 0
  %164 = vmatmul.mubr.bf16.gmra.mrb[0].mxu0 %v88
  %v165 = vpop.f32.mrb[0].mxu0
  %v166 = vadd.f32 %v60, %v165
  %v167 = vpop.f32.mrb[0].mxu0
  %v168 = vpop.f32.mrb[0].mxu0
  %v169 = vadd.f32 %v60, %v168
  %v170 = vpop.f32.mrb[0].mxu0
  %171 = vmatprep.mubr.bf16.mxu0 0
  %172 = vmatmul.mubr.bf16.gmra.mrb[0].mxu0 %v91
  %v173 = vpop.f32.mrb[0].mxu0
  %v174 = vadd.f32 %v60, %v173
  %v175 = vpop.f32.mrb[0].mxu0
  %v176 = vpop.f32.mrb[0].mxu0
  %v177 = vadd.f32 %v60, %v176
  %v178 = vpop.f32.mrb[0].mxu0
  %179 = vmatprep.mubr.bf16.mxu0 0
  %180 = vmatmul.mubr.bf16.gmra.mrb[0].mxu0 %v94
  %v181 = vpop.f32.mrb[0].mxu0
  %v182 = vadd.f32 %v60, %v181
  %v183 = vpop.f32.mrb[0].mxu0
  %v184 = vpop.f32.mrb[0].mxu0
  %v185 = vadd.f32 %v60, %v184
  %v186 = vpop.f32.mrb[0].mxu0
  %187 = vmatprep.mubr.bf16.mxu0 0
  %188 = vmatmul.mubr.bf16.gmra.mrb[0].mxu0 %v97
  %v189 = vpop.f32.mrb[0].mxu0
  %v190 = vadd.f32 %v60, %v189
  %v191 = vpop.f32.mrb[0].mxu0
  %v192 = vpop.f32.mrb[0].mxu0
  %v193 = vadd.f32 %v60, %v192
  %v194 = vpop.f32.mrb[0].mxu0
  %195 = vdwg.mxu0
  %v196 = vmax.f32 %v134, 0.0
  %v197 = vmax.f32 %v137, 0.0
  %v198 = vmax.f32 %v142, 0.0
  %v199 = vmax.f32 %v145, 0.0
  %v200 = vmax.f32 %v150, 0.0
  %v201 = vmax.f32 %v153, 0.0
  %v202 = vmax.f32 %v158, 0.0
  %v203 = vmax.f32 %v161, 0.0
  %v204 = vmax.f32 %v166, 0.0
  %v205 = vmax.f32 %v169, 0.0
  %v206 = vmax.f32 %v174, 0.0
  %v207 = vmax.f32 %v177, 0.0
  %v208 = vmax.f32 %v182, 0.0
  %v209 = vmax.f32 %v185, 0.0
  %v210 = vmax.f32 %v190, 0.0
  %v211 = vmax.f32 %v193, 0.0
  %v212 = vpack.c.bf16 %v197, %v196
  %v213 = vpack.c.bf16 %v199, %v198
  %v214 = vpack.c.bf16 %v201, %v200
  %v215 = vpack.c.bf16 %v203, %v202
  %v216 = vpack.c.bf16 %v205, %v204
  %v217 = vpack.c.bf16 %v207, %v206
  %v218 = vpack.c.bf16 %v209, %v208
  %v219 = vpack.c.bf16 %v211, %v210
  %v220 = vld [vmem:[%s3] sm:$0xf]
  %v221 = vld [vmem:[%s3 + $0x4] sm:$0xf]
  %v222 = vld [vmem:[%s3 + $0x8] sm:$0xf]
  %v223 = vld [vmem:[%s3 + $0xc] sm:$0xf]
  %v224 = vld [vmem:[%s4] sm:$0x1]
  %v226 = vlaneseq
  %v227 = vshrl.u32 %v226, 7
  %v228 = vsub.s32 0, %v227
  %v229 = vrot.slane %v224, %v228
  %v235 = vunpack.c.l.b16 %v220
  %v236 = vunpack.c.l.b16 %v221
  %v237 = vunpack.c.l.b16 %v222
  %v238 = vunpack.c.l.b16 %v223
  %v239 = vpack.c.b16 %v236, %v235
  %v240 = vpack.c.b16 %v238, %v237
  %v244 = vsel %vm74, %v212, 0
  %v247 = vsel %vm74, %v213, 0
  %v250 = vsel %vm74, %v214, 0
  %v253 = vsel %vm74, %v215, 0
  %v256 = vsel %vm74, %v216, 0
  %v259 = vsel %vm74, %v217, 0
  %v262 = vsel %vm74, %v218, 0
  %v265 = vsel %vm74, %v219, 0
  %267 = vmatprep.subr.bf16.mxu0 0
  %268 = vmatpush1.bf16.msra.mxu0 %v239
  %269 = vmatprep.subr.bf16.mxu0 0
  %270 = vmatpush1.bf16.msra.mxu0 %v240
  %271 = vmatprep.subr.bf16.mxu0 0
  %272 = vmatpush1.bf16.msra.mxu0 0
  %273 = vmatprep.subr.bf16.mxu0 0
  %274 = vmatpush1.bf16.msra.mxu0 0
  %275 = vmatprep.subr.bf16.mxu0 0
  %276 = vmatpush1.bf16.msra.mxu0 0
  %277 = vmatprep.subr.bf16.mxu0 0
  %278 = vmatpush1.bf16.msra.mxu0 0
  %279 = vmatprep.subr.bf16.mxu0 0
  %280 = vmatpush1.bf16.msra.mxu0 0
  %281 = vmatprep.subr.bf16.mxu0 0
  %282 = vmatpush1.bf16.msra.mxu0 0
  %283 = vmatprep.subr.bf16.mxu0 0
  %284 = vmatpush1.bf16.msra.mxu0 0
  %285 = vmatprep.subr.bf16.mxu0 0
  %286 = vmatpush1.bf16.msra.mxu0 0
  %287 = vmatprep.subr.bf16.mxu0 0
  %288 = vmatpush1.bf16.msra.mxu0 0
  %289 = vmatprep.subr.bf16.mxu0 0
  %290 = vmatpush1.bf16.msra.mxu0 0
  %291 = vmatprep.subr.bf16.mxu0 0
  %292 = vmatpush1.bf16.msra.mxu0 0
  %293 = vmatprep.subr.bf16.mxu0 0
  %294 = vmatpush1.bf16.msra.mxu0 0
  %295 = vmatprep.subr.bf16.mxu0 0
  %296 = vmatpush1.bf16.msra.mxu0 0
  %297 = vmatprep.subr.bf16.mxu0 0
  %298 = vmatpush1.bf16.msra.mxu0 0
  %299 = vmatprep.mubr.bf16.mxu0 0
  %300 = vmatmul.mubr.bf16.gmra.mrb[0].mxu0 %v244
  %v301 = vpop.f32.mrb[0].mxu0
  %v302 = vadd.f32 %v229, %v301
  %v303 = vpop.f32.mrb[0].mxu0
  %v304 = vpop.f32.mrb[0].mxu0
  %v305 = vadd.f32 %v229, %v304
  %v306 = vpop.f32.mrb[0].mxu0
  %307 = vmatprep.mubr.bf16.mxu0 0
  %308 = vmatmul.mubr.bf16.gmra.mrb[0].mxu0 %v247
  %v309 = vpop.f32.mrb[0].mxu0
  %v310 = vadd.f32 %v229, %v309
  %v311 = vpop.f32.mrb[0].mxu0
  %v312 = vpop.f32.mrb[0].mxu0
  %v313 = vadd.f32 %v229, %v312
  %v314 = vpop.f32.mrb[0].mxu0
  %315 = vmatprep.mubr.bf16.mxu0 0
  %316 = vmatmul.mubr.bf16.gmra.mrb[0].mxu0 %v250
  %v317 = vpop.f32.mrb[0].mxu0
  %v318 = vadd.f32 %v229, %v317
  %v319 = vpop.f32.mrb[0].mxu0
  %v320 = vpop.f32.mrb[0].mxu0
  %v321 = vadd.f32 %v229, %v320
  %v322 = vpop.f32.mrb[0].mxu0
  %323 = vmatprep.mubr.bf16.mxu0 0
  %324 = vmatmul.mubr.bf16.gmra.mrb[0].mxu0 %v253
  %v325 = vpop.f32.mrb[0].mxu0
  %v326 = vadd.f32 %v229, %v325
  %v327 = vpop.f32.mrb[0].mxu0
  %v328 = vpop.f32.mrb[0].mxu0
  %v329 = vadd.f32 %v229, %v328
  %v330 = vpop.f32.mrb[0].mxu0
  %331 = vmatprep.mubr.bf16.mxu0 0
  %332 = vmatmul.mubr.bf16.gmra.mrb[0].mxu0 %v256
  %v333 = vpop.f32.mrb[0].mxu0
  %v334 = vadd.f32 %v229, %v333
  %v335 = vpop.f32.mrb[0].mxu0
  %v336 = vpop.f32.mrb[0].mxu0
  %v337 = vadd.f32 %v229, %v336
  %v338 = vpop.f32.mrb[0].mxu0
  %339 = vmatprep.mubr.bf16.mxu0 0
  %340 = vmatmul.mubr.bf16.gmra.mrb[0].mxu0 %v259
  %v341 = vpop.f32.mrb[0].mxu0
  %v342 = vadd.f32 %v229, %v341
  %v343 = vpop.f32.mrb[0].mxu0
  %v344 = vpop.f32.mrb[0].mxu0
  %v345 = vadd.f32 %v229, %v344
  %v346 = vpop.f32.mrb[0].mxu0
  %347 = vmatprep.mubr.bf16.mxu0 0
  %348 = vmatmul.mubr.bf16.gmra.mrb[0].mxu0 %v262
  %v349 = vpop.f32.mrb[0].mxu0
  %v350 = vadd.f32 %v229, %v349
  %v351 = vpop.f32.mrb[0].mxu0
  %v352 = vpop.f32.mrb[0].mxu0
  %v353 = vadd.f32 %v229, %v352
  %v354 = vpop.f32.mrb[0].mxu0
  %355 = vmatprep.mubr.bf16.mxu0 0
  %356 = vmatmul.mubr.bf16.gmra.mrb[0].mxu0 %v265
  %v357 = vpop.f32.mrb[0].mxu0
  %v358 = vadd.f32 %v229, %v357
  %v359 = vpop.f32.mrb[0].mxu0
  %v360 = vpop.f32.mrb[0].mxu0
  %v361 = vadd.f32 %v229, %v360
  %v362 = vpop.f32.mrb[0].mxu0
  %363 = vdwg.mxu0
  %v364 = vmax.f32 %v302, 0.0
  %v365 = vmax.f32 %v305, 0.0
  %v366 = vmax.f32 %v310, 0.0
  %v367 = vmax.f32 %v313, 0.0
  %v368 = vmax.f32 %v318, 0.0
  %v369 = vmax.f32 %v321, 0.0
  %v370 = vmax.f32 %v326, 0.0
  %v371 = vmax.f32 %v329, 0.0
  %v372 = vmax.f32 %v334, 0.0
  %v373 = vmax.f32 %v337, 0.0
  %v374 = vmax.f32 %v342, 0.0
  %v375 = vmax.f32 %v345, 0.0
  %v376 = vmax.f32 %v350, 0.0
  %v377 = vmax.f32 %v353, 0.0
  %v378 = vmax.f32 %v358, 0.0
  %v379 = vmax.f32 %v361, 0.0
  %v380 = vpack.c.bf16 %v365, %v364
  %v381 = vpack.c.bf16 %v367, %v366
  %v382 = vpack.c.bf16 %v369, %v368
  %v383 = vpack.c.bf16 %v371, %v370
  %v384 = vpack.c.bf16 %v373, %v372
  %v385 = vpack.c.bf16 %v375, %v374
  %v386 = vpack.c.bf16 %v377, %v376
  %v387 = vpack.c.bf16 %v379, %v378
  %v388 = vld [vmem:[%s5] sm:$0xf]
  %v389 = vld [vmem:[%s5 + $0x4] sm:$0xf]
  %v390 = vld [vmem:[%s5 + $0x8] sm:$0xf]
  %v391 = vld [vmem:[%s5 + $0xc] sm:$0xf]
  %v392 = vld [vmem:[%s6] sm:$0x1]
  %v394 = vlaneseq
  %v395 = vshrl.u32 %v394, 7
  %v396 = vsub.s32 0, %v395
  %v397 = vrot.slane %v392, %v396
  %v403 = vunpack.c.l.b16 %v388
  %v404 = vunpack.c.l.b16 %v389
  %v405 = vunpack.c.l.b16 %v390
  %v406 = vunpack.c.l.b16 %v391
  %v407 = vpack.c.b16 %v404, %v403
  %v408 = vpack.c.b16 %v406, %v405
  %v412 = vsel %vm74, %v380, 0
  %v415 = vsel %vm74, %v381, 0
  %v418 = vsel %vm74, %v382, 0
  %v421 = vsel %vm74, %v383, 0
  %v424 = vsel %vm74, %v384, 0
  %v427 = vsel %vm74, %v385, 0
  %v430 = vsel %vm74, %v386, 0
  %v433 = vsel %vm74, %v387, 0
  %435 = vmatprep.subr.bf16.mxu0 0
  %436 = vmatpush1.bf16.msra.mxu0 %v407
  %437 = vmatprep.subr.bf16.mxu0 0
  %438 = vmatpush1.bf16.msra.mxu0 %v408
  %439 = vmatprep.subr.bf16.mxu0 0
  %440 = vmatpush1.bf16.msra.mxu0 0
  %441 = vmatprep.subr.bf16.mxu0 0
  %442 = vmatpush1.bf16.msra.mxu0 0
  %443 = vmatprep.subr.bf16.mxu0 0
  %444 = vmatpush1.bf16.msra.mxu0 0
  %445 = vmatprep.subr.bf16.mxu0 0
  %446 = vmatpush1.bf16.msra.mxu0 0
  %447 = vmatprep.subr.bf16.mxu0 0
  %448 = vmatpush1.bf16.msra.mxu0 0
  %449 = vmatprep.subr.bf16.mxu0 0
  %450 = vmatpush1.bf16.msra.mxu0 0
  %451 = vmatprep.subr.bf16.mxu0 0
  %452 = vmatpush1.bf16.msra.mxu0 0
  %453 = vmatprep.subr.bf16.mxu0 0
  %454 = vmatpush1.bf16.msra.mxu0 0
  %455 = vmatprep.subr.bf16.mxu0 0
  %456 = vmatpush1.bf16.msra.mxu0 0
  %457 = vmatprep.subr.bf16.mxu0 0
  %458 = vmatpush1.bf16.msra.mxu0 0
  %459 = vmatprep.subr.bf16.mxu0 0
  %460 = vmatpush1.bf16.msra.mxu0 0
  %461 = vmatprep.subr.bf16.mxu0 0
  %462 = vmatpush1.bf16.msra.mxu0 0
  %463 = vmatprep.subr.bf16.mxu0 0
  %464 = vmatpush1.bf16.msra.mxu0 0
  %465 = vmatprep.subr.bf16.mxu0 0
  %466 = vmatpush1.bf16.msra.mxu0 0
  %467 = vmatprep.mubr.bf16.mxu0 0
  %468 = vmatmul.mubr.bf16.gmra.mrb[0].mxu0 %v412
  %v469 = vpop.f32.mrb[0].mxu0
  %v470 = vadd.f32 %v397, %v469
  %v471 = vpop.f32.mrb[0].mxu0
  %v472 = vpop.f32.mrb[0].mxu0
  %v473 = vadd.f32 %v397, %v472
  %v474 = vpop.f32.mrb[0].mxu0
  %475 = vmatprep.mubr.bf16.mxu0 0
  %476 = vmatmul.mubr.bf16.gmra.mrb[0].mxu0 %v415
  %v477 = vpop.f32.mrb[0].mxu0
  %v478 = vadd.f32 %v397, %v477
  %v479 = vpop.f32.mrb[0].mxu0
  %v480 = vpop.f32.mrb[0].mxu0
  %v481 = vadd.f32 %v397, %v480
  %v482 = vpop.f32.mrb[0].mxu0
  %483 = vmatprep.mubr.bf16.mxu0 0
  %484 = vmatmul.mubr.bf16.gmra.mrb[0].mxu0 %v418
  %v485 = vpop.f32.mrb[0].mxu0
  %v486 = vadd.f32 %v397, %v485
  %v487 = vpop.f32.mrb[0].mxu0
  %v488 = vpop.f32.mrb[0].mxu0
  %v489 = vadd.f32 %v397, %v488
  %v490 = vpop.f32.mrb[0].mxu0
  %491 = vmatprep.mubr.bf16.mxu0 0
  %492 = vmatmul.mubr.bf16.gmra.mrb[0].mxu0 %v421
  %v493 = vpop.f32.mrb[0].mxu0
  %v494 = vadd.f32 %v397, %v493
  %v495 = vpop.f32.mrb[0].mxu0
  %v496 = vpop.f32.mrb[0].mxu0
  %v497 = vadd.f32 %v397, %v496
  %v498 = vpop.f32.mrb[0].mxu0
  %499 = vmatprep.mubr.bf16.mxu0 0
  %500 = vmatmul.mubr.bf16.gmra.mrb[0].mxu0 %v424
  %v501 = vpop.f32.mrb[0].mxu0
  %v502 = vadd.f32 %v397, %v501
  %v503 = vpop.f32.mrb[0].mxu0
  %v504 = vpop.f32.mrb[0].mxu0
  %v505 = vadd.f32 %v397, %v504
  %v506 = vpop.f32.mrb[0].mxu0
  %507 = vmatprep.mubr.bf16.mxu0 0
  %508 = vmatmul.mubr.bf16.gmra.mrb[0].mxu0 %v427
  %v509 = vpop.f32.mrb[0].mxu0
  %v510 = vadd.f32 %v397, %v509
  %v511 = vpop.f32.mrb[0].mxu0
  %v512 = vpop.f32.mrb[0].mxu0
  %v513 = vadd.f32 %v397, %v512
  %v514 = vpop.f32.mrb[0].mxu0
  %515 = vmatprep.mubr.bf16.mxu0 0
  %516 = vmatmul.mubr.bf16.gmra.mrb[0].mxu0 %v430
  %v517 = vpop.f32.mrb[0].mxu0
  %v518 = vadd.f32 %v397, %v517
  %v519 = vpop.f32.mrb[0].mxu0
  %v520 = vpop.f32.mrb[0].mxu0
  %v521 = vadd.f32 %v397, %v520
  %v522 = vpop.f32.mrb[0].mxu0
  %523 = vmatprep.mubr.bf16.mxu0 0
  %524 = vmatmul.mubr.bf16.gmra.mrb[0].mxu0 %v433
  %v525 = vpop.f32.mrb[0].mxu0
  %v526 = vadd.f32 %v397, %v525
  %v527 = vpop.f32.mrb[0].mxu0
  %v528 = vpop.f32.mrb[0].mxu0
  %v529 = vadd.f32 %v397, %v528
  %v530 = vpop.f32.mrb[0].mxu0
  %531 = vdwg.mxu0
  %vm532 = vcmask 64512
  %v533 = vsel %vm532, %v470, 0.0
  %v534 = vsel %vm532, %v473, 0.0
  %v535 = vadd.f32 %v533, %v534
  %v536 = vsel %vm532, %v478, 0.0
  %v537 = vadd.f32 %v535, %v536
  %v538 = vsel %vm532, %v481, 0.0
  %v539 = vadd.f32 %v537, %v538
  %v540 = vsel %vm532, %v486, 0.0
  %v541 = vadd.f32 %v539, %v540
  %v542 = vsel %vm532, %v489, 0.0
  %v543 = vadd.f32 %v541, %v542
  %v544 = vsel %vm532, %v494, 0.0
  %v545 = vadd.f32 %v543, %v544
  %v546 = vsel %vm532, %v497, 0.0
  %v547 = vadd.f32 %v545, %v546
  %v548 = vsel %vm532, %v502, 0.0
  %v549 = vadd.f32 %v547, %v548
  %v550 = vsel %vm532, %v505, 0.0
  %v551 = vadd.f32 %v549, %v550
  %v552 = vsel %vm532, %v510, 0.0
  %v553 = vadd.f32 %v551, %v552
  %v554 = vsel %vm532, %v513, 0.0
  %v555 = vadd.f32 %v553, %v554
  %v556 = vsel %vm532, %v518, 0.0
  %v557 = vadd.f32 %v555, %v556
  %v558 = vsel %vm532, %v521, 0.0
  %v559 = vadd.f32 %v557, %v558
  %v560 = vsel %vm532, %v526, 0.0
  %v561 = vadd.f32 %v559, %v560
  %v562 = vsel %vm532, %v529, 0.0
  %v563 = vadd.f32 %v561, %v562
  %v564 = vrot.slane %v563, 4
  %v565 = vadd.f32 %v563, %v564
  %v566 = vrot.slane %v565, 2
  %v567 = vadd.f32 %v565, %v566
  %v568 = vrot.slane %v567, 1
  %v569 = vadd.f32 %v567, %v568
  %v570 = vmul.f32 %v569, 0.125
  %v571 = vsub.f32 %v470, %v570
  %v572 = vsub.f32 %v473, %v570
  %v573 = vsub.f32 %v478, %v570
  %v574 = vsub.f32 %v481, %v570
  %v575 = vsub.f32 %v486, %v570
  %v576 = vsub.f32 %v489, %v570
  %v577 = vsub.f32 %v494, %v570
  %v578 = vsub.f32 %v497, %v570
  %v579 = vsub.f32 %v502, %v570
  %v580 = vsub.f32 %v505, %v570
  %v581 = vsub.f32 %v510, %v570
  %v582 = vsub.f32 %v513, %v570
  %v583 = vsub.f32 %v518, %v570
  %v584 = vsub.f32 %v521, %v570
  %v585 = vsub.f32 %v526, %v570
  %v586 = vsub.f32 %v529, %v570
  %588 = vset.pattern.permute.xlu0 8
  %589 = vperm.xlu0 %588, %v470
  %v590 = vpop.permute.xlu0 %589
  %593 = vset.pattern.permute.xlu0 8
  %594 = vperm.xlu0 %593, %v473
  %v595 = vpop.permute.xlu0 %594
  %598 = vset.pattern.permute.xlu0 8
  %599 = vperm.xlu0 %598, %v478
  %v600 = vpop.permute.xlu0 %599
  %603 = vset.pattern.permute.xlu0 8
  %604 = vperm.xlu0 %603, %v481
  %v605 = vpop.permute.xlu0 %604
  %608 = vset.pattern.permute.xlu0 8
  %609 = vperm.xlu0 %608, %v486
  %v610 = vpop.permute.xlu0 %609
  %613 = vset.pattern.permute.xlu0 8
  %614 = vperm.xlu0 %613, %v489
  %v615 = vpop.permute.xlu0 %614
  %618 = vset.pattern.permute.xlu0 8
  %619 = vperm.xlu0 %618, %v494
  %v620 = vpop.permute.xlu0 %619
  %623 = vset.pattern.permute.xlu0 8
  %624 = vperm.xlu0 %623, %v497
  %v625 = vpop.permute.xlu0 %624
  %628 = vset.pattern.permute.xlu0 8
  %629 = vperm.xlu0 %628, %v502
  %v630 = vpop.permute.xlu0 %629
  %633 = vset.pattern.permute.xlu0 8
  %634 = vperm.xlu0 %633, %v505
  %v635 = vpop.permute.xlu0 %634
  %638 = vset.pattern.permute.xlu0 8
  %639 = vperm.xlu0 %638, %v510
  %v640 = vpop.permute.xlu0 %639
  %643 = vset.pattern.permute.xlu0 8
  %644 = vperm.xlu0 %643, %v513
  %v645 = vpop.permute.xlu0 %644
  %648 = vset.pattern.permute.xlu0 8
  %649 = vperm.xlu0 %648, %v518
  %v650 = vpop.permute.xlu0 %649
  %653 = vset.pattern.permute.xlu0 8
  %654 = vperm.xlu0 %653, %v521
  %v655 = vpop.permute.xlu0 %654
  %658 = vset.pattern.permute.xlu0 8
  %659 = vperm.xlu0 %658, %v526
  %v660 = vpop.permute.xlu0 %659
  %663 = vset.pattern.permute.xlu0 8
  %664 = vperm.xlu0 %663, %v529
  %v665 = vpop.permute.xlu0 %664
  %v667 = vadd.f32 %v590, %v571
  %v668 = vadd.f32 %v595, %v572
  %v669 = vadd.f32 %v600, %v573
  %v670 = vadd.f32 %v605, %v574
  %v671 = vadd.f32 %v610, %v575
  %v672 = vadd.f32 %v615, %v576
  %v673 = vadd.f32 %v620, %v577
  %v674 = vadd.f32 %v625, %v578
  %v675 = vadd.f32 %v630, %v579
  %v676 = vadd.f32 %v635, %v580
  %v677 = vadd.f32 %v640, %v581
  %v678 = vadd.f32 %v645, %v582
  %v679 = vadd.f32 %v650, %v583
  %v680 = vadd.f32 %v655, %v584
  %v681 = vadd.f32 %v660, %v585
  %v682 = vadd.f32 %v665, %v586
  %683 = vst.msk [vmem:[%s7] sm:$0xff] %vm532, %v667
  %684 = vst.msk [vmem:[%s7 + $0x8] sm:$0xff] %vm532, %v668
  %685 = vst.msk [vmem:[%s7 + $0x10] sm:$0xff] %vm532, %v669
  %686 = vst.msk [vmem:[%s7 + $0x18] sm:$0xff] %vm532, %v670
  %687 = vst.msk [vmem:[%s7 + $0x20] sm:$0xff] %vm532, %v671
  %688 = vst.msk [vmem:[%s7 + $0x28] sm:$0xff] %vm532, %v672
  %689 = vst.msk [vmem:[%s7 + $0x30] sm:$0xff] %vm532, %v673
  %690 = vst.msk [vmem:[%s7 + $0x38] sm:$0xff] %vm532, %v674
  %691 = vst.msk [vmem:[%s7 + $0x40] sm:$0xff] %vm532, %v675
  %692 = vst.msk [vmem:[%s7 + $0x48] sm:$0xff] %vm532, %v676
  %693 = vst.msk [vmem:[%s7 + $0x50] sm:$0xff] %vm532, %v677
  %694 = vst.msk [vmem:[%s7 + $0x58] sm:$0xff] %vm532, %v678
  %695 = vst.msk [vmem:[%s7 + $0x60] sm:$0xff] %vm532, %v679
  %696 = vst.msk [vmem:[%s7 + $0x68] sm:$0xff] %vm532, %v680
  %697 = vst.msk [vmem:[%s7 + $0x70] sm:$0xff] %vm532, %v681
  %698 = vst.msk [vmem:[%s7 + $0x78] sm:$0xff] %vm532, %v682
  // Predicated region
  $region30: #{dueling_qlnn_forward.1} parent=0 // pred_check
    _
  $region31: #{dueling_qlnn_forward.1} parent=0 // pred_check_branch
    %700 = sbr.rel (0) target = $region33
  $region32: #{dueling_qlnn_forward.1} parent=0 // pred_region
    _
  $region33: #{dueling_qlnn_forward.1} parent=0 // pred_fallthru
    _
  // Predicated region
  $region34: #{dueling_qlnn_forward.1} parent=0 // pred_check
    _
  $region35: #{dueling_qlnn_forward.1} parent=0 // pred_check_branch
    %702 = sbr.rel (0) target = $region37
  $region36: #{dueling_qlnn_forward.1} parent=0 // pred_region
    _
  $region37: #{dueling_qlnn_forward.1} parent=0 // pred_fallthru
    _

</llo_original>
